<compile_context>
chip_gen: v7x
topology: tpu7x:2x2x1
jax: 0.10.0
libtpu: 0.0.40
codegen_flags: <defaults>
</compile_context>

<pallas_src>
import functools

import jax
import jax.numpy as jnp
from jax.experimental import pallas as pl
from jax.experimental.pallas import tpu as pltpu

_LANE = 128                         # vreg lane width (last dim)
_SUBLANE_32 = 8                     # f32 sublane rows; 16 for bf16, 32 for 8-bit
_MAX_TILE_B = 512                   # default batch-tile cap
_VMEM_BUDGET = 44 * 1024 * 1024     # conservative: fits v7x's 64 MiB with headroom
_XLA_FALLBACK_MACS = 1 << 22        # below this, plain XLA beats pallas_call overhead


def _round_up(x, m):
    return (x + m - 1) // m * m


def _cdiv(a, b):
    return -(-a // b)


def _packed_sublane(dtype):
    # Rows per packed sublane group: 8 (f32) / 16 (bf16) / 32 (int8/fp8).
    return _SUBLANE_32 * (4 // jnp.dtype(dtype).itemsize)


def _apply_nl(h, kind):
    if kind == "relu":
        return jnp.maximum(h, 0.0)
    if kind == "sigmoid":
        return jax.nn.sigmoid(h)
    if kind == "tanh":
        return jnp.tanh(h)
    return h  # identity, matching the PyTorch module's `lambda a: a`


def _mlp_kernel(x_ref, w1_ref, b1_ref, w2_ref, b2_ref, w3_ref, b3_ref,
                o_ref, *, f1, f2, compute_dtype):
    # In-register cast: saves a whole wrapper pad/cast HBM pass over x.
    x = x_ref[...].astype(compute_dtype)

    # layer1 + nl1 (MXU matmul, f32 accumulation; bias/nonlinearity in f32)
    h1 = jnp.dot(x, w1_ref[...], preferred_element_type=jnp.float32)
    h1 = _apply_nl(h1 + b1_ref[...], f1)

    # layer2 + nl2
    h2 = jnp.dot(h1.astype(compute_dtype), w2_ref[...],
                 preferred_element_type=jnp.float32)
    h2 = _apply_nl(h2 + b2_ref[...], f2)

    # layer3 (no nonlinearity in forward())
    h3 = jnp.dot(h2.astype(compute_dtype), w3_ref[...],
                 preferred_element_type=jnp.float32)
    o_ref[...] = (h3 + b3_ref[...]).astype(o_ref.dtype)


def prepare_params(params, *, compute_dtype=jnp.bfloat16):
    """Pad + cast parameters ONCE; call outside the serving loop and reuse.

    Only the class dim is zero-padded (to a lane-dense multiple of 128 so the
    kernel's output store is an unmasked full-lane vst).  Weights go to
    compute_dtype (bf16 by default — native MXU rate on v5e/v6e/v7x); biases
    stay f32 (accumulation / nonlinearities are f32 in-kernel).
    """
    w1, b1 = params["w1"], params["b1"]
    w2, b2 = params["w2"], params["b2"]
    w3, b3 = params["w3"], params["b3"]
    num_classes = w3.shape[1]
    c_p = _round_up(num_classes, _LANE)
    pad_c = ((0, 0), (0, c_p - num_classes))
    return {
        "w1": w1.astype(compute_dtype), "b1": b1.astype(jnp.float32),
        "w2": w2.astype(compute_dtype), "b2": b2.astype(jnp.float32),
        "w3": jnp.pad(w3, pad_c).astype(compute_dtype),
        "b3": jnp.pad(b3, pad_c).astype(jnp.float32),
        "num_classes": num_classes,
        "compute_dtype": jnp.dtype(compute_dtype),
    }


def _choose_tile_b(batch, sublane, max_tile):
    b_al = _round_up(batch, sublane)
    if b_al <= 2 * sublane:
        return b_al                                   # tiny batch: one small tile
    if b_al <= max_tile:
        # Two tiles: gives v7x's 2nd TensorCore work and lets the step-1 x DMA
        # overlap step-0 compute.
        return _round_up(_cdiv(b_al, 2), sublane)
    # Large batch: near-max tiles, evened out so batch padding stays minimal.
    steps = _cdiv(b_al, max_tile)
    return _round_up(_cdiv(b_al, steps), sublane)


def _vmem_footprint_bytes(tile_b, f, n1, n2, c_p, x_isz, w_isz, o_isz):
    x_buf = 2 * tile_b * f * x_isz                    # double-buffered x tile
    o_buf = 2 * tile_b * c_p * o_isz                  # double-buffered out tile
    w_buf = (f * n1 + n1 * n2 + n2 * c_p) * w_isz     # single-buffered (Buffered(1))
    b_buf = (n1 + n2 + c_p) * 4
    act = tile_b * (n1 + n2 + c_p) * 4                # f32 intermediates h1/h2/h3
    return x_buf + o_buf + w_buf + b_buf + act


def net_forward(x, params, *, f1="relu", f2="relu",
                compute_dtype=jnp.bfloat16, tile_b=None, force_pallas=False):
    """Fused Pallas forward pass of Net.

    x:      [batch, num_features] float (cast to compute_dtype in-kernel)
    params: raw params (w1 [F,n1], b1 [1,n1], ..., weights stored [in, out])
            or the output of prepare_params() — prefer preparing once.
    Returns [batch, num_classes] float32.
    """
    if "num_classes" not in params:   # raw params: prepare on the fly (slower path)
        params = prepare_params(params, compute_dtype=compute_dtype)
    compute_dtype = params["compute_dtype"]
    w1, b1 = params["w1"], params["b1"]
    w2, b2 = params["w2"], params["b2"]
    w3, b3 = params["w3"], params["b3"]
    num_classes = params["num_classes"]

    batch, num_features = x.shape
    n1, n2, c_p = w1.shape[1], w2.shape[1], w3.shape[1]

    macs = batch * (num_features * n1 + n1 * n2 + n2 * num_classes)
    if not force_pallas and macs < _XLA_FALLBACK_MACS:
        # Tiny problem: pallas_call fixed overhead dominates -> plain XLA with
        # the same dtype handling as the kernel.
        h = _apply_nl(jnp.dot(x.astype(compute_dtype), w1,
                              preferred_element_type=jnp.float32) + b1, f1)
        h = _apply_nl(jnp.dot(h.astype(compute_dtype), w2,
                              preferred_element_type=jnp.float32) + b2, f2)
        out = jnp.dot(h.astype(compute_dtype), w3,
                      preferred_element_type=jnp.float32) + b3
        return out[:, :num_classes]

    sublane = _packed_sublane(compute_dtype)
    if tile_b is None:
        tile_b = _choose_tile_b(batch, sublane, _MAX_TILE_B)
    else:
        tile_b = max(sublane,
                     _round_up(min(tile_b, _round_up(batch, sublane)), sublane))

    out_dtype = compute_dtype        # slim writeback (bf16 default); f32 path stays f32
    x_isz = jnp.dtype(x.dtype).itemsize
    w_isz = jnp.dtype(compute_dtype).itemsize
    o_isz = jnp.dtype(out_dtype).itemsize

    # Shrink the tile if the footprint would blow the conservative VMEM budget
    # (v7x only has 64 MiB total).
    while (tile_b > sublane and
           _vmem_footprint_bytes(tile_b, num_features, n1, n2, c_p,
                                 x_isz, w_isz, o_isz) > _VMEM_BUDGET):
        tile_b = max(sublane, _round_up(tile_b // 2, sublane))

    b_p = _round_up(batch, tile_b)
    grid_b = b_p // tile_b
    # Only pay a padding pass over x when the tile does not divide the batch.
    xp = x if b_p == batch else jnp.pad(x, ((0, b_p - batch), (0, 0)))

    footprint = _vmem_footprint_bytes(tile_b, num_features, n1, n2, c_p,
                                      x_isz, w_isz, o_isz)
    vmem_limit = int(min(_VMEM_BUDGET,
                         max(footprint + (footprint >> 2) + (4 << 20), 16 << 20)))

    kernel = functools.partial(_mlp_kernel, f1=f1, f2=f2,
                               compute_dtype=compute_dtype)

    # x keeps its natural feature width (block last dim == full array dim is
    # legal); only the batch axis is tiled.
    x_spec = pl.BlockSpec((tile_b, num_features), lambda i: (i, 0),
                          memory_space=pltpu.VMEM)
    out_spec = pl.BlockSpec((tile_b, c_p), lambda i: (i, 0),
                            memory_space=pltpu.VMEM)

    def const_spec(a):
        # Constant block index -> fetched once, VMEM-resident across all batch
        # steps; single-buffered (the default 2nd buffer would be pure waste).
        return pl.BlockSpec(a.shape, lambda i: (0, 0),
                            memory_space=pltpu.VMEM,
                            pipeline_mode=pl.Buffered(1))

    # Cost estimate on logical (unpadded) dims.
    flops = 2 * batch * (num_features * n1 + n1 * n2 + n2 * num_classes)
    transcendentals = batch * ((n1 if f1 in ("sigmoid", "tanh") else 0)
                               + (n2 if f2 in ("sigmoid", "tanh") else 0))
    bytes_accessed = (x.size * x_isz
                      + sum(a.size * a.dtype.itemsize
                            for a in (w1, b1, w2, b2, w3, b3))
                      + batch * num_classes * o_isz)

    out_padded = pl.pallas_call(
        kernel,
        out_shape=jax.ShapeDtypeStruct((b_p, c_p), out_dtype),
        grid=(grid_b,),
        in_specs=[x_spec,
                  const_spec(w1), const_spec(b1),
                  const_spec(w2), const_spec(b2),
                  const_spec(w3), const_spec(b3)],
        out_specs=out_spec,
        compiler_params=pltpu.CompilerParams(
            dimension_semantics=("parallel",),
            vmem_limit_bytes=vmem_limit),
        cost_estimate=pl.CostEstimate(flops=flops,
                                      transcendentals=transcendentals,
                                      bytes_accessed=bytes_accessed),
    )(xp, w1, b1, w2, b2, w3, b3)

    return out_padded[:batch, :num_classes].astype(jnp.float32)


def init_params(key, num_features, n1, n2, num_classes):
    """Deterministic synthetic parameters (PyTorch-Linear-like uniform init)."""
    ks = jax.random.split(key, 6)

    def linear(kw, kb, fan_in, fan_out):
        bound = 1.0 / jnp.sqrt(fan_in)
        w = jax.random.uniform(kw, (fan_in, fan_out), jnp.float32,
                               minval=-bound, maxval=bound)
        b = jax.random.uniform(kb, (1, fan_out), jnp.float32,
                               minval=-bound, maxval=bound)
        return w, b

    w1, b1 = linear(ks[0], ks[1], num_features, n1)
    w2, b2 = linear(ks[2], ks[3], n1, n2)
    w3, b3 = linear(ks[4], ks[5], n2, num_classes)
    return {"w1": w1, "b1": b1, "w2": w2, "b2": b2, "w3": w3, "b3": b3}


def net_forward_ref(x, params, *, f1="relu", f2="relu"):
    """Pure-JAX reference for correctness checking."""
    h = _apply_nl(x @ params["w1"] + params["b1"], f1)
    h = _apply_nl(h @ params["w2"] + params["b2"], f2)
    return h @ params["w3"] + params["b3"]


if __name__ == "__main__":
    # Shapes consistent with the module: Net(n1=64, n2=32, f1, f2,
    # num_features=32, num_classes=4), batch of 8 samples.
    batch, num_features, n1, n2, num_classes = 8, 32, 64, 32, 4

    key = jax.random.PRNGKey(0)
    kx, kp, kx2, kp2 = jax.random.split(key, 4)
    x = jax.random.normal(kx, (batch, num_features), jnp.float32)
    params = init_params(kp, num_features, n1, n2, num_classes)
    ref = net_forward_ref(x, params, f1="relu", f2="relu")

    # -- Pallas kernel, f32 compute path: exact vs reference. ----------------
    prep_f32 = prepare_params(params, compute_dtype=jnp.float32)
    out = jax.block_until_ready(
        net_forward(x, prep_f32, f1="relu", f2="relu", force_pallas=True))
    assert out.shape == (batch, num_classes)
    assert jnp.allclose(out, ref, atol=1e-5, rtol=1e-5)

    # Other nonlinearities through the same kernel (f32).
    out_t = jax.block_until_ready(
        net_forward(x, prep_f32, f1="tanh", f2="sigmoid", force_pallas=True))
    ref_t = net_forward_ref(x, params, f1="tanh", f2="sigmoid")
    assert jnp.allclose(out_t, ref_t, atol=1e-5, rtol=1e-5)

    # -- Pallas kernel, default bf16 MXU path (all TPU generations). ---------
    prep_bf16 = prepare_params(params)                 # bf16 weights, f32 biases
    out_bf16 = jax.block_until_ready(
        net_forward(x, prep_bf16, f1="relu", f2="relu", force_pallas=True))
    assert jnp.allclose(out_bf16, ref, atol=5e-2, rtol=5e-2)

    # -- Tiny-size auto-dispatch falls back to plain XLA (same semantics). ---
    out_xla = jax.block_until_ready(
        net_forward(x, prep_f32, f1="relu", f2="relu"))
    assert jnp.allclose(out_xla, ref, atol=1e-5, rtol=1e-5)

    # -- Medium config: multi-step batch grid, batch padding, bf16 default. --
    mb, mf, mn1, mn2, mc = 1000, 256, 256, 128, 10
    xm = jax.random.normal(kx2, (mb, mf), jnp.float32)
    params_m = init_params(kp2, mf, mn1, mn2, mc)
    prep_m = prepare_params(params_m)                  # bf16 default
    out_m = jax.block_until_ready(net_forward(xm, prep_m, f1="relu", f2="tanh"))
    ref_m = net_forward_ref(xm, params_m, f1="relu", f2="tanh")
    assert out_m.shape == (mb, mc)
    assert jnp.allclose(out_m, ref_m, atol=7e-2, rtol=7e-2)

    # TODO(synk): Net.predict (softmax + single/separated voting + argmax) is
    # host-side inference glue, not part of forward(); not implemented here.
    print("KERNEL_OK")
</pallas_src>

<mosaic_0001>
module attributes {stable_mosaic.version = 11 : i64} {
  func.func @_mlp_kernel(%arg0: i32, %arg1: memref<8x32xf32, #tpu.memory_space<vmem>>, %arg2: memref<32x64xf32, #tpu.memory_space<vmem>>, %arg3: memref<1x64xf32, #tpu.memory_space<vmem>>, %arg4: memref<64x32xf32, #tpu.memory_space<vmem>>, %arg5: memref<1x32xf32, #tpu.memory_space<vmem>>, %arg6: memref<32x128xf32, #tpu.memory_space<vmem>>, %arg7: memref<1x128xf32, #tpu.memory_space<vmem>>, %arg8: memref<8x128xf32, #tpu.memory_space<vmem>>) attributes {dimension_semantics = [#tpu.dimension_semantics<parallel>], iteration_bounds = array<i64: 1>, scalar_prefetch = 0 : i64, scratch_operands = 0 : i64, tpu.core_type = #tpu.core_type<tc>, window_params = [{transform_indices = @transform_0, window_bounds = array<i64: 8, 32>}, {pipeline_mode = #tpu.pipeline_mode<synchronous>, transform_indices = @transform_1, window_bounds = array<i64: 32, 64>}, {pipeline_mode = #tpu.pipeline_mode<synchronous>, transform_indices = @transform_2, window_bounds = array<i64: 1, 64>}, {pipeline_mode = #tpu.pipeline_mode<synchronous>, transform_indices = @transform_3, window_bounds = array<i64: 64, 32>}, {pipeline_mode = #tpu.pipeline_mode<synchronous>, transform_indices = @transform_4, window_bounds = array<i64: 1, 32>}, {pipeline_mode = #tpu.pipeline_mode<synchronous>, transform_indices = @transform_5, window_bounds = array<i64: 32, 128>}, {pipeline_mode = #tpu.pipeline_mode<synchronous>, transform_indices = @transform_6, window_bounds = array<i64: 1, 128>}, {transform_indices = @transform_7, window_bounds = array<i64: 8, 128>}]} {
    %c0 = arith.constant 0 : index
    %c0_0 = arith.constant 0 : index
    %0 = vector.load %arg1[%c0, %c0_0] : memref<8x32xf32, #tpu.memory_space<vmem>>, vector<8x32xf32>
    %c0_1 = arith.constant 0 : index
    %c0_2 = arith.constant 0 : index
    %1 = vector.load %arg2[%c0_1, %c0_2] : memref<32x64xf32, #tpu.memory_space<vmem>>, vector<32x64xf32>
    %cst = arith.constant dense<0.000000e+00> : vector<8x64xf32>
    %2 = tpu.matmul %0, %1, %cst {dimension_numbers = #tpu.dot_dimension_numbers<[1], [0], [0], [1], [0, 0, 1, 1], [], []>} : vector<8x32xf32>, vector<32x64xf32>, vector<8x64xf32> -> vector<8x64xf32>
    %c0_3 = arith.constant 0 : index
    %c0_4 = arith.constant 0 : index
    %3 = vector.load %arg3[%c0_3, %c0_4] : memref<1x64xf32, #tpu.memory_space<vmem>>, vector<1x64xf32>
    %4 = vector.broadcast %3 : vector<1x64xf32> to vector<8x64xf32>
    %5 = arith.addf %2, %4 : vector<8x64xf32>
    %cst_5 = arith.constant 0.000000e+00 : f32
    %6 = vector.broadcast %cst_5 : f32 to vector<8x64xf32>
    %7 = arith.maximumf %5, %6 : vector<8x64xf32>
    %c0_6 = arith.constant 0 : index
    %c0_7 = arith.constant 0 : index
    %8 = vector.load %arg4[%c0_6, %c0_7] : memref<64x32xf32, #tpu.memory_space<vmem>>, vector<64x32xf32>
    %cst_8 = arith.constant dense<0.000000e+00> : vector<8x32xf32>
    %9 = tpu.matmul %7, %8, %cst_8 {dimension_numbers = #tpu.dot_dimension_numbers<[1], [0], [0], [1], [0, 0, 1, 1], [], []>} : vector<8x64xf32>, vector<64x32xf32>, vector<8x32xf32> -> vector<8x32xf32>
    %c0_9 = arith.constant 0 : index
    %c0_10 = arith.constant 0 : index
    %10 = vector.load %arg5[%c0_9, %c0_10] : memref<1x32xf32, #tpu.memory_space<vmem>>, vector<1x32xf32>
    %11 = vector.broadcast %10 : vector<1x32xf32> to vector<8x32xf32>
    %12 = arith.addf %9, %11 : vector<8x32xf32>
    %cst_11 = arith.constant 0.000000e+00 : f32
    %13 = vector.broadcast %cst_11 : f32 to vector<8x32xf32>
    %14 = arith.maximumf %12, %13 : vector<8x32xf32>
    %c0_12 = arith.constant 0 : index
    %c0_13 = arith.constant 0 : index
    %15 = vector.load %arg6[%c0_12, %c0_13] : memref<32x128xf32, #tpu.memory_space<vmem>>, vector<32x128xf32>
    %cst_14 = arith.constant dense<0.000000e+00> : vector<8x128xf32>
    %16 = tpu.matmul %14, %15, %cst_14 {dimension_numbers = #tpu.dot_dimension_numbers<[1], [0], [0], [1], [0, 0, 1, 1], [], []>} : vector<8x32xf32>, vector<32x128xf32>, vector<8x128xf32> -> vector<8x128xf32>
    %c0_15 = arith.constant 0 : index
    %c0_16 = arith.constant 0 : index
    %17 = vector.load %arg7[%c0_15, %c0_16] : memref<1x128xf32, #tpu.memory_space<vmem>>, vector<1x128xf32>
    %18 = vector.broadcast %17 : vector<1x128xf32> to vector<8x128xf32>
    %19 = arith.addf %16, %18 : vector<8x128xf32>
    %c0_17 = arith.constant 0 : index
    %c0_18 = arith.constant 0 : index
    %20 = vector.load %arg8[%c0_17, %c0_18] : memref<8x128xf32, #tpu.memory_space<vmem>>, vector<8x128xf32>
    tpu.vector_store %arg8[%c0_17, %c0_18], %19 {strides = array<i32>} : memref<8x128xf32, #tpu.memory_space<vmem>>, vector<8x128xf32>,
    return
  }
  func.func @transform_0(%arg0: i32) -> (i32, i32) {
    %c0_i32 = arith.constant 0 : i32
    %c0_i32_0 = arith.constant 0 : i32
    return %arg0, %c0_i32 : i32, i32
  }
  func.func @transform_1(%arg0: i32) -> (i32, i32) {
    %c0_i32 = arith.constant 0 : i32
    %c0_i32_0 = arith.constant 0 : i32
    %c0_i32_1 = arith.constant 0 : i32
    return %c0_i32, %c0_i32_0 : i32, i32
  }
  func.func @transform_2(%arg0: i32) -> (i32, i32) {
    %c0_i32 = arith.constant 0 : i32
    %c0_i32_0 = arith.constant 0 : i32
    %c0_i32_1 = arith.constant 0 : i32
    return %c0_i32, %c0_i32_0 : i32, i32
  }
  func.func @transform_3(%arg0: i32) -> (i32, i32) {
    %c0_i32 = arith.constant 0 : i32
    %c0_i32_0 = arith.constant 0 : i32
    %c0_i32_1 = arith.constant 0 : i32
    return %c0_i32, %c0_i32_0 : i32, i32
  }
  func.func @transform_4(%arg0: i32) -> (i32, i32) {
    %c0_i32 = arith.constant 0 : i32
    %c0_i32_0 = arith.constant 0 : i32
    %c0_i32_1 = arith.constant 0 : i32
    return %c0_i32, %c0_i32_0 : i32, i32
  }
  func.func @transform_5(%arg0: i32) -> (i32, i32) {
    %c0_i32 = arith.constant 0 : i32
    %c0_i32_0 = arith.constant 0 : i32
    %c0_i32_1 = arith.constant 0 : i32
    return %c0_i32, %c0_i32_0 : i32, i32
  }
  func.func @transform_6(%arg0: i32) -> (i32, i32) {
    %c0_i32 = arith.constant 0 : i32
    %c0_i32_0 = arith.constant 0 : i32
    %c0_i32_1 = arith.constant 0 : i32
    return %c0_i32, %c0_i32_0 : i32, i32
  }
  func.func @transform_7(%arg0: i32) -> (i32, i32) {
    %c0_i32 = arith.constant 0 : i32
    %c0_i32_0 = arith.constant 0 : i32
    return %arg0, %c0_i32 : i32, i32
  }
}

</mosaic_0001>

<llo_original>
// kernel: tpu_custom_call.1
$region0: #{tpu_custom_call.1}
  #allocation0 [shape = 'u32[]', space=smem, size = 0x4, offset = 0x4, fixed_abs, tag = 'smem constant byte address 0x4 - core index']
  #allocation1 [shape = 'u32[144,128]{1,0:T(1,128)}', space=vmem, size = 0x12000, scoped, tag = 'internal scratch']
  %s0 = inlined_call_operand.vmem [shape: f32[8,32], index: 0, kind: input, shape index: {}]
  %s1 = inlined_call_operand.vmem [shape: f32[32,64], index: 1, kind: input, shape index: {}]
  %s2 = inlined_call_operand.vmem [shape: f32[1,64], index: 2, kind: input, shape index: {}]
  %s3 = inlined_call_operand.vmem [shape: f32[64,32], index: 3, kind: input, shape index: {}]
  %s4 = inlined_call_operand.vmem [shape: f32[1,32], index: 4, kind: input, shape index: {}]
  %s5 = inlined_call_operand.vmem [shape: f32[32,128], index: 5, kind: input, shape index: {}]
  %s6 = inlined_call_operand.vmem [shape: f32[1,128], index: 6, kind: input, shape index: {}]
  %s7 = inlined_call_operand.hbm [shape: f32[8,128], index: 7, kind: output, shape index: {}]
  %s8 = sld [smem:[#allocation0]]
  $region38: #{tpu_custom_call.1} parent=0
    _
  %s10 = ssub.s32 1, %s8
  %s11 = scalar_select 0, %s10, %s8
  $region1: #{tpu_custom_call.1} parent=0
    #allocation2 [shape = 'u8[4096]{0}', space=vmem, size = 0x1000, scoped, tag = 'output window, operand 0, single buffered']
    #allocation3 [shape = 's32[1]{0}', space=sflag, size = 0x4, scoped, tag = 'scoped memory for tpu_custom_call.1']
    %12 = vsyncpa [#allocation3], 0
    // Predicated region
    $region2: #{tpu_custom_call.1} parent=1 // pred_check
      _
    $region3: #{tpu_custom_call.1} parent=1 // pred_check_branch
      %14 = sbr.rel (0) target = $region5
    $region4: #{tpu_custom_call.1} parent=1 // pred_region
      _
    $region5: #{tpu_custom_call.1} parent=1 // pred_fallthru
      _
    // Predicated region
    $region6: #{tpu_custom_call.1} parent=1 // pred_check
      _
    $region7: #{tpu_custom_call.1} parent=1 // pred_check_branch
      %16 = sbr.rel (0) target = $region9
    $region8: #{tpu_custom_call.1} parent=1 // pred_region
      _
    $region9: #{tpu_custom_call.1} parent=1 // pred_fallthru
      _
    // Predicated region
    $region10: #{tpu_custom_call.1} parent=1 // pred_check
      _
    $region11: #{tpu_custom_call.1} parent=1 // pred_check_branch
      %18 = sbr.rel (0) target = $region13
    $region12: #{tpu_custom_call.1} parent=1 // pred_region
      _
    $region13: #{tpu_custom_call.1} parent=1 // pred_fallthru
      _
    // Predicated region
    $region14: #{tpu_custom_call.1} parent=1 // pred_check
      _
    $region15: #{tpu_custom_call.1} parent=1 // pred_check_branch
      %20 = sbr.rel (0) target = $region17
    $region16: #{tpu_custom_call.1} parent=1 // pred_region
      _
    $region17: #{tpu_custom_call.1} parent=1 // pred_fallthru
      _
    // Predicated region
    $region18: #{tpu_custom_call.1} parent=1 // pred_check
      _
    $region19: #{tpu_custom_call.1} parent=1 // pred_check_branch
      %22 = sbr.rel (0) target = $region21
    $region20: #{tpu_custom_call.1} parent=1 // pred_region
      _
    $region21: #{tpu_custom_call.1} parent=1 // pred_fallthru
      _
    // Predicated region
    $region22: #{tpu_custom_call.1} parent=1 // pred_check
      _
    $region23: #{tpu_custom_call.1} parent=1 // pred_check_branch
      %24 = sbr.rel (0) target = $region25
    $region24: #{tpu_custom_call.1} parent=1 // pred_region
      _
    $region25: #{tpu_custom_call.1} parent=1 // pred_fallthru
      _
    // Predicated region
    $region26: #{tpu_custom_call.1} parent=1 // pred_check
      _
    $region27: #{tpu_custom_call.1} parent=1 // pred_check_branch
      %26 = sbr.rel (0) target = $region29
    $region28: #{tpu_custom_call.1} parent=1 // pred_region
      _
    $region29: #{tpu_custom_call.1} parent=1 // pred_fallthru
      _
    %v27 = vld [vmem:[%s0] sm:$0xff]
    %v28 = vld [vmem:[%s1] sm:$0xff]
    %v29 = vld [vmem:[%s1 + $0x8] sm:$0xff]
    %v30 = vld [vmem:[%s1 + $0x10] sm:$0xff]
    %v31 = vld [vmem:[%s1 + $0x18] sm:$0xff]
    %v32 = vld [vmem:[%s2] sm:$0x1]
    %v34 = vlaneseq
    %v35 = vshrl.u32 %v34, 7
    %v36 = vsub.s32 0, %v35
    %v37 = vrot.slane %v32, %v36
    %vm39 = vcmask 261120
    %v41 = vsel %vm39, %v27, 0
    %43 = vmatprep.subr.mxu0 0.0
    %44 = vmatpush1.msra.mxu0 %v28
    %45 = vmatprep.subr.mxu0 0.0
    %46 = vmatpush1.msra.mxu0 %v29
    %47 = vmatprep.subr.mxu0 0.0
    %48 = vmatpush1.msra.mxu0 %v30
    %49 = vmatprep.subr.mxu0 0.0
    %50 = vmatpush1.msra.mxu0 %v31
    %51 = vmatprep.subr.mxu0 0.0
    %52 = vmatpush1.msra.mxu0 0.0
    %53 = vmatprep.subr.mxu0 0.0
    %54 = vmatpush1.msra.mxu0 0.0
    %55 = vmatprep.subr.mxu0 0.0
    %56 = vmatpush1.msra.mxu0 0.0
    %57 = vmatprep.subr.mxu0 0.0
    %58 = vmatpush1.msra.mxu0 0.0
    %59 = vmatprep.subr.mxu0 0.0
    %60 = vmatpush1.msra.mxu0 0.0
    %61 = vmatprep.subr.mxu0 0.0
    %62 = vmatpush1.msra.mxu0 0.0
    %63 = vmatprep.subr.mxu0 0.0
    %64 = vmatpush1.msra.mxu0 0.0
    %65 = vmatprep.subr.mxu0 0.0
    %66 = vmatpush1.msra.mxu0 0.0
    %67 = vmatprep.subr.mxu0 0.0
    %68 = vmatpush1.msra.mxu0 0.0
    %69 = vmatprep.subr.mxu0 0.0
    %70 = vmatpush1.msra.mxu0 0.0
    %71 = vmatprep.subr.mxu0 0.0
    %72 = vmatpush1.msra.mxu0 0.0
    %73 = vmatprep.subr.mxu0 0.0
    %74 = vmatpush1.msra.mxu0 0.0
    %75 = vmatprep.subr.mxu0 0.0
    %76 = vmatpush1.msra.mxu0 0.0
    %77 = vmatprep.subr.mxu0 0.0
    %78 = vmatpush1.msra.mxu0 0.0
    %79 = vmatprep.subr.mxu0 0.0
    %80 = vmatpush1.msra.mxu0 0.0
    %81 = vmatprep.subr.mxu0 0.0
    %82 = vmatpush1.msra.mxu0 0.0
    %83 = vmatprep.subr.mxu0 0.0
    %84 = vmatpush1.msra.mxu0 0.0
    %85 = vmatprep.subr.mxu0 0.0
    %86 = vmatpush1.msra.mxu0 0.0
    %87 = vmatprep.subr.mxu0 0.0
    %88 = vmatpush1.msra.mxu0 0.0
    %89 = vmatprep.subr.mxu0 0.0
    %90 = vmatpush1.msra.mxu0 0.0
    %91 = vmatprep.subr.mxu0 0.0
    %92 = vmatpush1.msra.mxu0 0.0
    %93 = vmatprep.subr.mxu0 0.0
    %94 = vmatpush1.msra.mxu0 0.0
    %95 = vmatprep.subr.mxu0 0.0
    %96 = vmatpush1.msra.mxu0 0.0
    %97 = vmatprep.subr.mxu0 0.0
    %98 = vmatpush1.msra.mxu0 0.0
    %99 = vmatprep.subr.mxu0 0.0
    %100 = vmatpush1.msra.mxu0 0.0
    %101 = vmatprep.subr.mxu0 0.0
    %102 = vmatpush1.msra.mxu0 0.0
    %103 = vmatprep.subr.mxu0 0.0
    %104 = vmatpush1.msra.mxu0 0.0
    %105 = vmatprep.subr.mxu0 0.0
    %106 = vmatpush1.msra.mxu0 0.0
    %107 = vmatprep.mubr.f32.mxu0 0.0
    %108 = vmatmul.mubr.f32.gmra.mrb[0].mxu0 %v41
    %v109 = vpop.f32.mrb[0].mxu0
    %v110 = vadd.f32 %v37, %v109
    %v111 = vpop.f32.mrb[0].mxu0
    %112 = vdwg.mxu0
    %v113 = vmax.f32 %v110, 0.0
    %v114 = vld [vmem:[%s3] sm:$0xff]
    %v115 = vld [vmem:[%s3 + $0x8] sm:$0xff]
    %v116 = vld [vmem:[%s3 + $0x10] sm:$0xff]
    %v117 = vld [vmem:[%s3 + $0x18] sm:$0xff]
    %v118 = vld [vmem:[%s3 + $0x20] sm:$0xff]
    %v119 = vld [vmem:[%s3 + $0x28] sm:$0xff]
    %v120 = vld [vmem:[%s3 + $0x30] sm:$0xff]
    %v121 = vld [vmem:[%s3 + $0x38] sm:$0xff]
    %v122 = vld [vmem:[%s4] sm:$0x1]
    %v124 = vlaneseq
    %v125 = vshrl.u32 %v124, 7
    %v126 = vsub.s32 0, %v125
    %v127 = vrot.slane %v122, %v126
    %vm129 = vcmask 523264
    %v131 = vsel %vm129, %v113, 0
    %133 = vmatprep.subr.mxu0 0.0
    %134 = vmatpush1.msra.mxu0 %v114
    %135 = vmatprep.subr.mxu0 0.0
    %136 = vmatpush1.msra.mxu0 %v115
    %137 = vmatprep.subr.mxu0 0.0
    %138 = vmatpush1.msra.mxu0 %v116
    %139 = vmatprep.subr.mxu0 0.0
    %140 = vmatpush1.msra.mxu0 %v117
    %141 = vmatprep.subr.mxu0 0.0
    %142 = vmatpush1.msra.mxu0 %v118
    %143 = vmatprep.subr.mxu0 0.0
    %144 = vmatpush1.msra.mxu0 %v119
    %145 = vmatprep.subr.mxu0 0.0
    %146 = vmatpush1.msra.mxu0 %v120
    %147 = vmatprep.subr.mxu0 0.0
    %148 = vmatpush1.msra.mxu0 %v121
    %149 = vmatprep.subr.mxu0 0.0
    %150 = vmatpush1.msra.mxu0 0.0
    %151 = vmatprep.subr.mxu0 0.0
    %152 = vmatpush1.msra.mxu0 0.0
    %153 = vmatprep.subr.mxu0 0.0
    %154 = vmatpush1.msra.mxu0 0.0
    %155 = vmatprep.subr.mxu0 0.0
    %156 = vmatpush1.msra.mxu0 0.0
    %157 = vmatprep.subr.mxu0 0.0
    %158 = vmatpush1.msra.mxu0 0.0
    %159 = vmatprep.subr.mxu0 0.0
    %160 = vmatpush1.msra.mxu0 0.0
    %161 = vmatprep.subr.mxu0 0.0
    %162 = vmatpush1.msra.mxu0 0.0
    %163 = vmatprep.subr.mxu0 0.0
    %164 = vmatpush1.msra.mxu0 0.0
    %165 = vmatprep.subr.mxu0 0.0
    %166 = vmatpush1.msra.mxu0 0.0
    %167 = vmatprep.subr.mxu0 0.0
    %168 = vmatpush1.msra.mxu0 0.0
    %169 = vmatprep.subr.mxu0 0.0
    %170 = vmatpush1.msra.mxu0 0.0
    %171 = vmatprep.subr.mxu0 0.0
    %172 = vmatpush1.msra.mxu0 0.0
    %173 = vmatprep.subr.mxu0 0.0
    %174 = vmatpush1.msra.mxu0 0.0
    %175 = vmatprep.subr.mxu0 0.0
    %176 = vmatpush1.msra.mxu0 0.0
    %177 = vmatprep.subr.mxu0 0.0
    %178 = vmatpush1.msra.mxu0 0.0
    %179 = vmatprep.subr.mxu0 0.0
    %180 = vmatpush1.msra.mxu0 0.0
    %181 = vmatprep.subr.mxu0 0.0
    %182 = vmatpush1.msra.mxu0 0.0
    %183 = vmatprep.subr.mxu0 0.0
    %184 = vmatpush1.msra.mxu0 0.0
    %185 = vmatprep.subr.mxu0 0.0
    %186 = vmatpush1.msra.mxu0 0.0
    %187 = vmatprep.subr.mxu0 0.0
    %188 = vmatpush1.msra.mxu0 0.0
    %189 = vmatprep.subr.mxu0 0.0
    %190 = vmatpush1.msra.mxu0 0.0
    %191 = vmatprep.subr.mxu0 0.0
    %192 = vmatpush1.msra.mxu0 0.0
    %193 = vmatprep.subr.mxu0 0.0
    %194 = vmatpush1.msra.mxu0 0.0
    %195 = vmatprep.subr.mxu0 0.0
    %196 = vmatpush1.msra.mxu0 0.0
    %197 = vmatprep.mubr.f32.mxu0 0.0
    %198 = vmatmul.mubr.f32.gmra.mrb[0].mxu0 %v131
    %v199 = vpop.f32.mrb[0].mxu0
    %v200 = vadd.f32 %v127, %v199
    %v201 = vpop.f32.mrb[0].mxu0
    %202 = vdwg.mxu0
    %v203 = vmax.f32 %v200, 0.0
    %v204 = vld [vmem:[%s5] sm:$0xff]
    %v205 = vld [vmem:[%s5 + $0x8] sm:$0xff]
    %v206 = vld [vmem:[%s5 + $0x10] sm:$0xff]
    %v207 = vld [vmem:[%s5 + $0x18] sm:$0xff]
    %v208 = vld [vmem:[%s6] sm:$0x1]
    %v210 = vlaneseq
    %v211 = vshrl.u32 %v210, 7
    %v212 = vsub.s32 0, %v211
    %v213 = vrot.slane %v208, %v212
    %v216 = vsel %vm39, %v203, 0
    %218 = vmatprep.subr.mxu0 0.0
    %219 = vmatpush1.msra.mxu0 %v204
    %220 = vmatprep.subr.mxu0 0.0
    %221 = vmatpush1.msra.mxu0 %v205
    %222 = vmatprep.subr.mxu0 0.0
    %223 = vmatpush1.msra.mxu0 %v206
    %224 = vmatprep.subr.mxu0 0.0
    %225 = vmatpush1.msra.mxu0 %v207
    %226 = vmatprep.subr.mxu0 0.0
    %227 = vmatpush1.msra.mxu0 0.0
    %228 = vmatprep.subr.mxu0 0.0
    %229 = vmatpush1.msra.mxu0 0.0
    %230 = vmatprep.subr.mxu0 0.0
    %231 = vmatpush1.msra.mxu0 0.0
    %232 = vmatprep.subr.mxu0 0.0
    %233 = vmatpush1.msra.mxu0 0.0
    %234 = vmatprep.subr.mxu0 0.0
    %235 = vmatpush1.msra.mxu0 0.0
    %236 = vmatprep.subr.mxu0 0.0
    %237 = vmatpush1.msra.mxu0 0.0
    %238 = vmatprep.subr.mxu0 0.0
    %239 = vmatpush1.msra.mxu0 0.0
    %240 = vmatprep.subr.mxu0 0.0
    %241 = vmatpush1.msra.mxu0 0.0
    %242 = vmatprep.subr.mxu0 0.0
    %243 = vmatpush1.msra.mxu0 0.0
    %244 = vmatprep.subr.mxu0 0.0
    %245 = vmatpush1.msra.mxu0 0.0
    %246 = vmatprep.subr.mxu0 0.0
    %247 = vmatpush1.msra.mxu0 0.0
    %248 = vmatprep.subr.mxu0 0.0
    %249 = vmatpush1.msra.mxu0 0.0
    %250 = vmatprep.subr.mxu0 0.0
    %251 = vmatpush1.msra.mxu0 0.0
    %252 = vmatprep.subr.mxu0 0.0
    %253 = vmatpush1.msra.mxu0 0.0
    %254 = vmatprep.subr.mxu0 0.0
    %255 = vmatpush1.msra.mxu0 0.0
    %256 = vmatprep.subr.mxu0 0.0
    %257 = vmatpush1.msra.mxu0 0.0
    %258 = vmatprep.subr.mxu0 0.0
    %259 = vmatpush1.msra.mxu0 0.0
    %260 = vmatprep.subr.mxu0 0.0
    %261 = vmatpush1.msra.mxu0 0.0
    %262 = vmatprep.subr.mxu0 0.0
    %263 = vmatpush1.msra.mxu0 0.0
    %264 = vmatprep.subr.mxu0 0.0
    %265 = vmatpush1.msra.mxu0 0.0
    %266 = vmatprep.subr.mxu0 0.0
    %267 = vmatpush1.msra.mxu0 0.0
    %268 = vmatprep.subr.mxu0 0.0
    %269 = vmatpush1.msra.mxu0 0.0
    %270 = vmatprep.subr.mxu0 0.0
    %271 = vmatpush1.msra.mxu0 0.0
    %272 = vmatprep.subr.mxu0 0.0
    %273 = vmatpush1.msra.mxu0 0.0
    %274 = vmatprep.subr.mxu0 0.0
    %275 = vmatpush1.msra.mxu0 0.0
    %276 = vmatprep.subr.mxu0 0.0
    %277 = vmatpush1.msra.mxu0 0.0
    %278 = vmatprep.subr.mxu0 0.0
    %279 = vmatpush1.msra.mxu0 0.0
    %280 = vmatprep.subr.mxu0 0.0
    %281 = vmatpush1.msra.mxu0 0.0
    %282 = vmatprep.mubr.f32.mxu0 0.0
    %283 = vmatmul.mubr.f32.gmra.mrb[0].mxu0 %v216
    %v284 = vpop.f32.mrb[0].mxu0
    %v285 = vadd.f32 %v213, %v284
    %v286 = vpop.f32.mrb[0].mxu0
    %287 = vdwg.mxu0
    %288 = vst [vmem:[#allocation2] sm:$0xff] %v285
    // Predicated region
    $region30: #{tpu_custom_call.1} parent=1 // pred_check
      _
    $region31: #{tpu_custom_call.1} parent=1 // pred_check_branch
      %290 = sbr.rel (0) target = $region33
    $region32: #{tpu_custom_call.1} parent=1 // pred_region
      %s292 = ssub.s32 128, 128
      %293 = vsyncadd [#allocation3], %s292
      %s295 = sshll.u32 [#allocation2], 4
      %s296 = int_to_ptr.vmem [resolvable:$true] %s295
      %298 = dma.vmem_to_hbm [thread:$0]  %s296, 128, %s7, [#allocation3]
    $region33: #{tpu_custom_call.1} parent=1 // pred_fallthru
      _
    // Predicated region
    $region34: #{tpu_custom_call.1} parent=1 // pred_check
      _
    $region35: #{tpu_custom_call.1} parent=1 // pred_check_branch
      %300 = sbr.rel (0) target = $region37
    $region36: #{tpu_custom_call.1} parent=1 // pred_region
      %301 = dma.done [#allocation3], 128
    $region37: #{tpu_custom_call.1} parent=1 // pred_fallthru
      _
    %302 = vsyncpa [#allocation3], 1

</llo_original>
